<compile_context>
chip_gen: v7x
topology: tpu7x:2x2x1
jax: 0.10.0
libtpu: 0.0.40
codegen_flags: <defaults>
</compile_context>

<pallas_src>
import functools

import jax
import jax.numpy as jnp
from jax.experimental import pallas as pl
from jax.experimental.pallas import tpu as pltpu

EPS = 1e-5
LANE = 128


# ---------------------------------------------------------------------------
# Small helpers
# ---------------------------------------------------------------------------
def _round_up(x, m):
    return (x + m - 1) // m * m


def _pick_div(n, cands):
    for c in cands:
        if n % c == 0:
            return c
    return n


def _pick_tm(m):
    # 256 is a good default across v5e/v6e/v7x (fits the 16/32 MiB scoped VMEM
    # budgets with full-K bf16 tiles double-buffered).
    return 256 if m >= 256 else _round_up(m, 8)


def _vmem_limit_bytes():
    try:
        cap = pltpu.get_tpu_info().vmem_capacity_bytes
    except Exception:
        cap = 64 * 1024 * 1024
    return int(min(cap // 2, 96 * 1024 * 1024))


def _compiler_params(dims):
    return pltpu.CompilerParams(dimension_semantics=dims,
                                vmem_limit_bytes=_vmem_limit_bytes())


def _pad_rows(a, mp):
    m = a.shape[0]
    if mp == m:
        return a
    return jnp.pad(a, ((0, mp - m), (0, 0)))


# ---------------------------------------------------------------------------
# Pallas kernels
# ---------------------------------------------------------------------------
def _mm_bn_act_kernel(x_ref, w_ref, shift_ref, o_ref, acc_ref, *, relu):
    # K-tiled: acc += x @ w ; at last k: act(acc + shift)
    @pl.when(pl.program_id(2) == 0)
    def _():
        acc_ref[...] = jnp.zeros_like(acc_ref)

    acc_ref[...] += jnp.dot(x_ref[...], w_ref[...],
                            preferred_element_type=jnp.float32)

    @pl.when(pl.program_id(2) == pl.num_programs(2) - 1)
    def _():
        out = acc_ref[...] + shift_ref[...]
        if relu:
            out = jnp.maximum(out, 0.0)
        o_ref[...] = out.astype(o_ref.dtype)


def _mm_bn_res_relu_kernel(x_ref, w_ref, shift_ref, res_ref, o_ref, acc_ref):
    # conv3 + identity-shortcut residual: relu(x @ w + shift + res)
    @pl.when(pl.program_id(2) == 0)
    def _():
        acc_ref[...] = jnp.zeros_like(acc_ref)

    acc_ref[...] += jnp.dot(x_ref[...], w_ref[...],
                            preferred_element_type=jnp.float32)

    @pl.when(pl.program_id(2) == pl.num_programs(2) - 1)
    def _():
        out = acc_ref[...] + shift_ref[...] + res_ref[...].astype(jnp.float32)
        o_ref[...] = jnp.maximum(out, 0.0).astype(o_ref.dtype)


def _mm2_bn_add_relu_kernel(a_ref, wa_ref, sha_ref, b_ref, wb_ref, shb_ref,
                            o_ref):
    # conv3 + projection-shortcut fused: relu(a @ wa + sha + b @ wb + shb)
    # (full-K blocks; the two dots have different contraction sizes, so no
    #  shared K reduction axis — ResNet K <= 2048 fits comfortably in VMEM).
    acc = jnp.dot(a_ref[...], wa_ref[...], preferred_element_type=jnp.float32)
    acc = acc + jnp.dot(b_ref[...], wb_ref[...],
                        preferred_element_type=jnp.float32)
    out = acc + sha_ref[...] + shb_ref[...]
    o_ref[...] = jnp.maximum(out, 0.0).astype(o_ref.dtype)


def _conv3x3_bn_relu_kernel(xp_ref, w_ref, shift_ref, o_ref, *, stride):
    # 3x3 conv as 9 accumulated matmuls over shifted windows of the spatially
    # padded input block (no materialized im2col / 9x HBM blow-up).
    # xp_ref: (1, Hp, Wp, C) bf16, w_ref: (9, C, tn) bf16, shift: (1, tn) f32
    _, Ho, Wo, tn = o_ref.shape
    C = w_ref.shape[1]
    acc = jnp.zeros((Ho * Wo, tn), jnp.float32)
    for ky in range(3):
        for kx in range(3):
            if stride == 1:
                patch = xp_ref[0, ky:ky + Ho, kx:kx + Wo, :]
            else:
                patch = xp_ref[0, pl.ds(ky, Ho, stride=stride),
                               pl.ds(kx, Wo, stride=stride), :]
            acc = acc + jnp.dot(patch.reshape(Ho * Wo, C),
                                w_ref[ky * 3 + kx],
                                preferred_element_type=jnp.float32)
    out = jnp.maximum(acc + shift_ref[...], 0.0)
    o_ref[...] = out.reshape(1, Ho, Wo, tn).astype(o_ref.dtype)


# ---------------------------------------------------------------------------
# pallas_call wrappers
# ---------------------------------------------------------------------------
def matmul_bn_act(x2d, w, shift, *, relu, out_dtype):
    """act((x2d @ w) + shift); x2d/w bf16, f32 accumulation."""
    M, K = x2d.shape
    Cout = w.shape[1]
    tm = _pick_tm(M)
    mp = _round_up(M, tm)
    x2d = _pad_rows(x2d, mp)
    tn = _pick_div(Cout, (256, 128))
    tk = _pick_div(K, (512, 256, 128))
    out = pl.pallas_call(
        functools.partial(_mm_bn_act_kernel, relu=relu),
        out_shape=jax.ShapeDtypeStruct((mp, Cout), out_dtype),
        grid=(mp // tm, Cout // tn, K // tk),
        in_specs=[
            pl.BlockSpec((tm, tk), lambda i, j, k: (i, k)),
            pl.BlockSpec((tk, tn), lambda i, j, k: (k, j)),
            pl.BlockSpec((1, tn), lambda i, j, k: (0, j)),
        ],
        out_specs=pl.BlockSpec((tm, tn), lambda i, j, k: (i, j)),
        scratch_shapes=[pltpu.VMEM((tm, tn), jnp.float32)],
        compiler_params=_compiler_params(("parallel", "parallel", "arbitrary")),
    )(x2d, w, shift)
    return out[:M]


def matmul_bn_res_relu(x2d, w, shift, res):
    """relu((x2d @ w) + shift + res) — conv3 with identity shortcut."""
    M, K = x2d.shape
    Cout = w.shape[1]
    tm = _pick_tm(M)
    mp = _round_up(M, tm)
    x2d = _pad_rows(x2d, mp)
    res = _pad_rows(res, mp)
    tn = _pick_div(Cout, (256, 128))
    tk = _pick_div(K, (512, 256, 128))
    out = pl.pallas_call(
        _mm_bn_res_relu_kernel,
        out_shape=jax.ShapeDtypeStruct((mp, Cout), jnp.float32),
        grid=(mp // tm, Cout // tn, K // tk),
        in_specs=[
            pl.BlockSpec((tm, tk), lambda i, j, k: (i, k)),
            pl.BlockSpec((tk, tn), lambda i, j, k: (k, j)),
            pl.BlockSpec((1, tn), lambda i, j, k: (0, j)),
            pl.BlockSpec((tm, tn), lambda i, j, k: (i, j)),
        ],
        out_specs=pl.BlockSpec((tm, tn), lambda i, j, k: (i, j)),
        scratch_shapes=[pltpu.VMEM((tm, tn), jnp.float32)],
        compiler_params=_compiler_params(("parallel", "parallel", "arbitrary")),
    )(x2d, w, shift, res)
    return out[:M]


def matmul2_bn_add_relu(a2d, wa, sha, b2d, wb, shb):
    """relu(a2d @ wa + sha + b2d @ wb + shb) — conv3 + projection shortcut."""
    M, Ka = a2d.shape
    Kb = b2d.shape[1]
    Cout = wa.shape[1]
    tm = _pick_tm(M)
    mp = _round_up(M, tm)
    a2d = _pad_rows(a2d, mp)
    b2d = _pad_rows(b2d, mp)
    tn = _pick_div(Cout, (256, 128))
    out = pl.pallas_call(
        _mm2_bn_add_relu_kernel,
        out_shape=jax.ShapeDtypeStruct((mp, Cout), jnp.float32),
        grid=(mp // tm, Cout // tn),
        in_specs=[
            pl.BlockSpec((tm, Ka), lambda i, j: (i, 0)),
            pl.BlockSpec((Ka, tn), lambda i, j: (0, j)),
            pl.BlockSpec((1, tn), lambda i, j: (0, j)),
            pl.BlockSpec((tm, Kb), lambda i, j: (i, 0)),
            pl.BlockSpec((Kb, tn), lambda i, j: (0, j)),
            pl.BlockSpec((1, tn), lambda i, j: (0, j)),
        ],
        out_specs=pl.BlockSpec((tm, tn), lambda i, j: (i, j)),
        compiler_params=_compiler_params(("parallel", "parallel")),
    )(a2d, wa, sha, b2d, wb, shb)
    return out[:M]


def conv3x3_bn_relu(xp, w9, shift, *, stride, out_dtype):
    """3x3 conv (pad already applied spatially) + shift + relu."""
    N, Hp, Wp, C = xp.shape
    Cout = w9.shape[-1]
    Ho = (Hp - 3) // stride + 1
    Wo = (Wp - 3) // stride + 1
    tn = _pick_div(Cout, (256, 128))
    return pl.pallas_call(
        functools.partial(_conv3x3_bn_relu_kernel, stride=stride),
        out_shape=jax.ShapeDtypeStruct((N, Ho, Wo, Cout), out_dtype),
        grid=(N, Cout // tn),
        in_specs=[
            pl.BlockSpec((1, Hp, Wp, C), lambda n, j: (n, 0, 0, 0)),
            pl.BlockSpec((9, C, tn), lambda n, j: (0, 0, j)),
            pl.BlockSpec((1, tn), lambda n, j: (0, j)),
        ],
        out_specs=pl.BlockSpec((1, Ho, Wo, tn), lambda n, j: (n, 0, 0, j)),
        compiler_params=_compiler_params(("parallel", "parallel")),
    )(xp, w9, shift)


# ---------------------------------------------------------------------------
# Glue (BN folding, channel padding, reshapes)
# ---------------------------------------------------------------------------
def _bn_fold(bn):
    gamma, beta, mean, var = bn
    scale = gamma / jnp.sqrt(var + EPS)
    shift = beta - mean * scale
    return scale, shift


def _fold_pad_1x1(w, bn, kp, np_):
    scale, shift = _bn_fold(bn)
    k, n = w.shape
    wf = jnp.pad(w * scale[None, :], ((0, kp - k), (0, np_ - n)))
    sh = jnp.pad(shift, (0, np_ - n)).astype(jnp.float32)[None, :]
    return wf.astype(jnp.bfloat16), sh


def _fold_pad_3x3(w, bn, kp, np_):
    scale, shift = _bn_fold(bn)
    kh, kw, k, n = w.shape
    wf = (w * scale[None, None, None, :]).reshape(kh * kw, k, n)
    wf = jnp.pad(wf, ((0, 0), (0, kp - k), (0, np_ - n)))
    sh = jnp.pad(shift, (0, np_ - n)).astype(jnp.float32)[None, :]
    return wf.astype(jnp.bfloat16), sh


def bottleneck_forward(x, params, stride=1):
    """x: (N, H, W, Cin) NHWC f32.  Returns (N, Ho, Wo, 4*planes) f32."""
    N, H, W, Cin = x.shape
    planes = params["w1"].shape[1]
    exp_planes = params["w3"].shape[1]
    cin_p = _round_up(Cin, LANE)
    pln_p = _round_up(planes, LANE)
    exp_p = _round_up(exp_planes, LANE)
    has_proj = (stride != 1) or (Cin != exp_planes)

    # Fold BN scale into weights, zero-pad channels to lane multiples, bf16.
    w1f, b1 = _fold_pad_1x1(params["w1"], params["bn1"], cin_p, pln_p)
    w2f, b2 = _fold_pad_3x3(params["w2"], params["bn2"], pln_p, pln_p)
    w3f, b3 = _fold_pad_1x1(params["w3"], params["bn3"], pln_p, exp_p)

    x_p = jnp.pad(x, ((0, 0), (0, 0), (0, 0), (0, cin_p - Cin)))
    x_bf = x_p.astype(jnp.bfloat16)

    # conv1 (1x1) + bn1 + relu
    out1 = matmul_bn_act(x_bf.reshape(N * H * W, cin_p), w1f, b1,
                         relu=True, out_dtype=jnp.bfloat16)
    out1 = out1.reshape(N, H, W, pln_p)

    # conv2 (3x3, stride, pad=1) + bn2 + relu — 9-tap in-kernel accumulation
    out1p = jnp.pad(out1, ((0, 0), (1, 1), (1, 1), (0, 0)))
    out2 = conv3x3_bn_relu(out1p, w2f, b2, stride=stride,
                           out_dtype=jnp.bfloat16)
    Ho, Wo = out2.shape[1], out2.shape[2]
    out2_2d = out2.reshape(N * Ho * Wo, pln_p)

    # conv3 (1x1) + bn3 + shortcut add + relu (fused)
    if has_proj:
        wscf, bsc = _fold_pad_1x1(params["w_sc"], params["bn_sc"], cin_p, exp_p)
        xs = x_bf[:, ::stride, ::stride, :].reshape(N * Ho * Wo, cin_p)
        out = matmul2_bn_add_relu(out2_2d, w3f, b3, xs, wscf, bsc)
    else:
        res = x_p.reshape(N * Ho * Wo, exp_p)  # cin_p == exp_p here (f32)
        out = matmul_bn_res_relu(out2_2d, w3f, b3, res)

    return out.reshape(N, Ho, Wo, exp_p)[..., :exp_planes]


# ---------------------------------------------------------------------------
# Pure-JAX reference (lax.conv, f32) for verification
# ---------------------------------------------------------------------------
def reference_forward(x, params, stride=1):
    def conv(x, w, s=1, pad="VALID"):
        return jax.lax.conv_general_dilated(
            x, w, (s, s), pad, dimension_numbers=("NHWC", "HWIO", "NHWC"))

    def bn(y, p):
        g, b, m, v = p
        return (y - m) / jnp.sqrt(v + EPS) * g + b

    out = jax.nn.relu(bn(conv(x, params["w1"][None, None]), params["bn1"]))
    out = jax.nn.relu(bn(conv(out, params["w2"], stride, ((1, 1), (1, 1))),
                         params["bn2"]))
    out = bn(conv(out, params["w3"][None, None]), params["bn3"])
    if stride != 1 or x.shape[-1] != params["w3"].shape[1]:
        sc = bn(conv(x, params["w_sc"][None, None], stride), params["bn_sc"])
    else:
        sc = x
    return jax.nn.relu(out + sc)


# ---------------------------------------------------------------------------
# Parameter init + main
# ---------------------------------------------------------------------------
def init_params(key, in_planes, planes, stride):
    exp_planes = 4 * planes
    keys = jax.random.split(key, 16)

    def bn_init(k, c):
        k1, k2, k3, k4 = jax.random.split(k, 4)
        gamma = jax.random.uniform(k1, (c,), jnp.float32, 0.5, 1.5)
        beta = 0.1 * jax.random.normal(k2, (c,), jnp.float32)
        mean = 0.1 * jax.random.normal(k3, (c,), jnp.float32)
        var = jax.random.uniform(k4, (c,), jnp.float32, 0.5, 1.5)
        return (gamma, beta, mean, var)

    params = {
        "w1": 0.1 * jax.random.normal(keys[0], (in_planes, planes), jnp.float32),
        "bn1": bn_init(keys[1], planes),
        "w2": 0.1 * jax.random.normal(keys[2], (3, 3, planes, planes), jnp.float32),
        "bn2": bn_init(keys[3], planes),
        "w3": 0.1 * jax.random.normal(keys[4], (planes, exp_planes), jnp.float32),
        "bn3": bn_init(keys[5], exp_planes),
    }
    if stride != 1 or in_planes != exp_planes:
        params["w_sc"] = 0.1 * jax.random.normal(
            keys[6], (in_planes, exp_planes), jnp.float32)
        params["bn_sc"] = bn_init(keys[7], exp_planes)
    return params


if __name__ == "__main__":
    key = jax.random.PRNGKey(0)
    N, H, W = 2, 16, 16
    configs = [
        dict(in_planes=4, planes=4, stride=1),   # projection shortcut (4 != 16)
        dict(in_planes=16, planes=4, stride=1),  # identity shortcut
    ]
    for cfg in configs:
        kx, kp, key = jax.random.split(key, 3)
        x = jax.random.normal(kx, (N, H, W, cfg["in_planes"]), jnp.float32)
        params = init_params(kp, cfg["in_planes"], cfg["planes"], cfg["stride"])

        out = jax.block_until_ready(
            bottleneck_forward(x, params, stride=cfg["stride"]))
        ref = jax.block_until_ready(
            reference_forward(x, params, stride=cfg["stride"]))

        assert out.shape == ref.shape == (N, H, W, 4 * cfg["planes"])
        # bf16 MXU operands with f32 accumulation -> tolerance loosened vs the
        # pure-f32 reference.
        err = float(jnp.max(jnp.abs(out - ref)))
        assert jnp.allclose(out, ref, rtol=2e-2, atol=2e-2), err

    print("KERNEL_OK")
</pallas_src>

<mosaic_0001>
module attributes {stable_mosaic.version = 11 : i64} {
  func.func @_mm_bn_act_kernel(%arg0: i32, %arg1: i32, %arg2: i32, %arg3: memref<256x128xbf16, #tpu.memory_space<vmem>>, %arg4: memref<128x128xbf16, #tpu.memory_space<vmem>>, %arg5: memref<1x128xf32, #tpu.memory_space<vmem>>, %arg6: memref<256x128xbf16, #tpu.memory_space<vmem>>, %arg7: memref<256x128xf32, #tpu.memory_space<vmem>>) attributes {dimension_semantics = [#tpu.dimension_semantics<parallel>, #tpu.dimension_semantics<parallel>, #tpu.dimension_semantics<arbitrary>], iteration_bounds = array<i64: 2, 1, 1>, scalar_prefetch = 0 : i64, scratch_operands = 1 : i64, tpu.core_type = #tpu.core_type<tc>, window_params = [{transform_indices = @transform_0, window_bounds = array<i64: 256, 128>}, {transform_indices = @transform_1, window_bounds = array<i64: 128, 128>}, {transform_indices = @transform_2, window_bounds = array<i64: 1, 128>}, {transform_indices = @transform_3, window_bounds = array<i64: 256, 128>}]} {
    %c0_i32 = arith.constant 0 : i32
    %0 = arith.cmpi eq, %arg2, %c0_i32 : i32
    %1 = arith.extui %0 : i1 to i32
    %c0_i32_0 = arith.constant 0 : i32
    %2 = arith.cmpi ne, %1, %c0_i32_0 : i32
    scf.if %2 {
      %cst_10 = arith.constant 0.000000e+00 : f32
      %12 = vector.broadcast %cst_10 : f32 to vector<256x128xf32>
      %c0_11 = arith.constant 0 : index
      %c0_12 = arith.constant 0 : index
      %13 = vector.load %arg7[%c0_11, %c0_12] : memref<256x128xf32, #tpu.memory_space<vmem>>, vector<256x128xf32>
      tpu.vector_store %arg7[%c0_11, %c0_12], %12 {strides = array<i32>} : memref<256x128xf32, #tpu.memory_space<vmem>>, vector<256x128xf32>,
    } else {
    }
    %c0 = arith.constant 0 : index
    %c0_1 = arith.constant 0 : index
    %3 = vector.load %arg7[%c0, %c0_1] : memref<256x128xf32, #tpu.memory_space<vmem>>, vector<256x128xf32>
    %c0_2 = arith.constant 0 : index
    %c0_3 = arith.constant 0 : index
    %4 = vector.load %arg3[%c0_2, %c0_3] : memref<256x128xbf16, #tpu.memory_space<vmem>>, vector<256x128xbf16>
    %c0_4 = arith.constant 0 : index
    %c0_5 = arith.constant 0 : index
    %5 = vector.load %arg4[%c0_4, %c0_5] : memref<128x128xbf16, #tpu.memory_space<vmem>>, vector<128x128xbf16>
    %cst = arith.constant dense<0.000000e+00> : vector<256x128xf32>
    %6 = tpu.matmul %4, %5, %cst {dimension_numbers = #tpu.dot_dimension_numbers<[1], [0], [0], [1], [0, 0, 1, 1], [], []>} : vector<256x128xbf16>, vector<128x128xbf16>, vector<256x128xf32> -> vector<256x128xf32>
    %7 = arith.addf %3, %6 : vector<256x128xf32>
    %c0_6 = arith.constant 0 : index
    %c0_7 = arith.constant 0 : index
    %8 = vector.load %arg7[%c0_6, %c0_7] : memref<256x128xf32, #tpu.memory_space<vmem>>, vector<256x128xf32>
    tpu.vector_store %arg7[%c0_6, %c0_7], %7 {strides = array<i32>} : memref<256x128xf32, #tpu.memory_space<vmem>>, vector<256x128xf32>,
    %c0_i32_8 = arith.constant 0 : i32
    %9 = arith.cmpi eq, %arg2, %c0_i32_8 : i32
    %10 = arith.extui %9 : i1 to i32
    %c0_i32_9 = arith.constant 0 : i32
    %11 = arith.cmpi ne, %10, %c0_i32_9 : i32
    scf.if %11 {
      %c0_10 = arith.constant 0 : index
      %c0_11 = arith.constant 0 : index
      %12 = vector.load %arg7[%c0_10, %c0_11] : memref<256x128xf32, #tpu.memory_space<vmem>>, vector<256x128xf32>
      %c0_12 = arith.constant 0 : index
      %c0_13 = arith.constant 0 : index
      %13 = vector.load %arg5[%c0_12, %c0_13] : memref<1x128xf32, #tpu.memory_space<vmem>>, vector<1x128xf32>
      %14 = vector.broadcast %13 : vector<1x128xf32> to vector<256x128xf32>
      %15 = arith.addf %12, %14 : vector<256x128xf32>
      %cst_14 = arith.constant 0.000000e+00 : f32
      %16 = vector.broadcast %cst_14 : f32 to vector<256x128xf32>
      %17 = arith.maximumf %15, %16 : vector<256x128xf32>
      %18 = arith.truncf %17 : vector<256x128xf32> to vector<256x128xbf16>
      %c0_15 = arith.constant 0 : index
      %c0_16 = arith.constant 0 : index
      %19 = vector.load %arg6[%c0_15, %c0_16] : memref<256x128xbf16, #tpu.memory_space<vmem>>, vector<256x128xbf16>
      tpu.vector_store %arg6[%c0_15, %c0_16], %18 {strides = array<i32>} : memref<256x128xbf16, #tpu.memory_space<vmem>>, vector<256x128xbf16>,
    } else {
    }
    return
  }
  func.func @transform_0(%arg0: i32, %arg1: i32, %arg2: i32) -> (i32, i32) {
    %c0_i32 = arith.constant 0 : i32
    return %arg0, %arg2 : i32, i32
  }
  func.func @transform_1(%arg0: i32, %arg1: i32, %arg2: i32) -> (i32, i32) {
    %c0_i32 = arith.constant 0 : i32
    return %arg2, %arg1 : i32, i32
  }
  func.func @transform_2(%arg0: i32, %arg1: i32, %arg2: i32) -> (i32, i32) {
    %c0_i32 = arith.constant 0 : i32
    %c0_i32_0 = arith.constant 0 : i32
    return %c0_i32, %arg1 : i32, i32
  }
  func.func @transform_3(%arg0: i32, %arg1: i32, %arg2: i32) -> (i32, i32) {
    %c0_i32 = arith.constant 0 : i32
    return %arg0, %arg1 : i32, i32
  }
}

</mosaic_0001>

<llo_original>
// kernel: tpu_custom_call.1
$region0: #{tpu_custom_call.1}
  #allocation0 [shape = 'u32[]', space=smem, size = 0x4, offset = 0x4, fixed_abs, tag = 'smem constant byte address 0x4 - core index']
  #allocation1 [shape = 'u32[144,128]{1,0:T(1,128)}', space=vmem, size = 0x12000, scoped, tag = 'internal scratch']
  #allocation2 [shape = 'f32[256,128]{1,0:T(8,128)}', space=vmem, size = 0x20000, scoped, tag = 'scratch operand']
  %s0 = inlined_call_operand.hbm [shape: bf16[512,128], index: 0, kind: input, shape index: {}]
  %s1 = inlined_call_operand.hbm [shape: bf16[128,128], index: 1, kind: input, shape index: {}]
  %s2 = inlined_call_operand.vmem [shape: f32[1,128], index: 2, kind: input, shape index: {}]
  %s3 = inlined_call_operand.hbm [shape: bf16[512,128], index: 3, kind: output, shape index: {}]
  %s4 = sld [smem:[#allocation0]]
  $region61: #{tpu_custom_call.1} parent=0
    _
  %s6 = ssub.s32 1, %s4
  %s7 = scalar_select 0, %s6, %s4
  $region1: #{tpu_custom_call.1} parent=0
    #allocation3 [shape = 'u8[131072]{0}', space=vmem, size = 0x20000, scoped, tag = 'input window, operand 0']
    #allocation4 [shape = 's32[2]{0}', space=sflag, size = 0x8, scoped, tag = 'scoped memory for tpu_custom_call.1']
    #allocation5 [shape = 's32[2]{0}', space=sflag, size = 0x8, scoped, tag = 'scoped memory for tpu_custom_call.1']
    #allocation6 [shape = 'u8[32768]{0}', space=vmem, size = 0x8000, scoped, tag = 'input window, operand 1, single buffered']
    #allocation7 [shape = 's32[1]{0}', space=sflag, size = 0x4, scoped, tag = 'scoped memory for tpu_custom_call.1']
    #allocation8 [shape = 'u8[131072]{0}', space=vmem, size = 0x20000, scoped, tag = 'output window, operand 0']
    %8 = vsyncpa [#allocation4], 0
    %s9 = scalar_lea.sflag [#allocation4], 1
    %10 = vsyncpa %s9, 0
    %11 = vsyncpa [#allocation7], 0
    %12 = vsyncpa [#allocation5], 0
    %s13 = scalar_lea.sflag [#allocation5], 1
    %14 = vsyncpa %s13, 0
    loop: start=0, step=1, limit=4
    $region2: #{tpu_custom_call.1} parent=1 // loop_pre_header
      _
    $region3: #{tpu_custom_call.1} parent=1 // loop_header
      %s16 = sphi 0, %s20
      %p17 = scmp.ge.s32.totalorder %s16, 4
      %s23 = sphi 0, %s42
      %s24 = sphi 0, %s38
      %s25 = sphi 0, %s34
      %s26 = sphi 0, %s23
      %s27 = sphi 0, %s24
      %s28 = sphi 0, %s25
      %s29 = sphi 0, %s26
      %s30 = sphi 0, %s27
      %s31 = sphi 0, %s28
      %s47 = sphi 0, %s49
      %s50 = sphi 0, %s47
      %s51 = sphi 0, %s50
      %s67 = sphi 0, %s51
      %s75 = sphi 0, %s77
      %s78 = sphi 0, %s75
      %s79 = sphi 0, %s78
      %s95 = sphi 0, %s79
      %s101 = sphi 0, %s103
      %s104 = sphi 0, %s101
      %s105 = sphi 0, %s104
      %s121 = sphi 0, %s105
      %s129 = sphi 0, %s131
      %s132 = sphi 0, %s129
      %s133 = sphi 0, %s132
      %s149 = sphi 0, %s133
    $region4: #{tpu_custom_call.1} parent=1 // loop_header_branch
      %19 = sbr.rel (%p17) target = $region8
    $region5: #{tpu_custom_call.1} parent=1 // loop_body
      %s21 = ssub.s32 %s16, 1
      %s22 = ssub.s32 %s16, 2
      %s32 = sadd.s32 1, %s25
      %p33 = scmp.ge.s32.totalorder %s32, 1
      %s34 = scalar_select %p33, 0, %s32
      %s35 = sadd.s32 1, %s24
      %s36 = scalar_select %p33, %s35, %s24
      %p37 = scmp.ge.s32.totalorder %s36, 1
      %s38 = scalar_select %p37, 0, %s36
      %s39 = sadd.s32 1, %s23
      %s40 = scalar_select %p37, %s39, %s23
      %p41 = scmp.ge.s32.totalorder %s40, 2
      %s42 = scalar_select %p41, 0, %s40
      %s43 = ssub.s32 %s23, %s42
      %s44 = ssub.s32 %s25, %s34
      %s45 = sor.u32 %s43, %s44
      %p46 = scmp.eq.s32.totalorder %s45, 0
      %s48 = sadd.s32 %s47, 1
      %s49 = scalar_select %p46, %s47, %s48
      %p52 = pneg %p46
      %p53 = scmp.eq.s32.totalorder %s16, 1
      %p54 = por %p52, %p53
      %p55 = scmp.ne.s32.totalorder %s47, %s50
      %p56 = scmp.eq.s32.totalorder %s16, 0
      %p57 = por %p55, %p56
      %p58 = scmp.ne.s32.totalorder %s47, %s50
      %p59 = scmp.eq.s32.totalorder %s21, 1
      %p60 = por %p58, %p59
      %p61 = scmp.ne.s32.totalorder %s50, %s51
      %p62 = scmp.eq.s32.totalorder %s21, 0
      %p63 = por %p61, %p62
      %p64 = scmp.ne.s32.totalorder %s50, %s51
      %p65 = scmp.eq.s32.totalorder %s22, 1
      %p66 = por %p64, %p65
      %p68 = scmp.ne.s32.totalorder %s51, %s67
      %p69 = scmp.eq.s32.totalorder %s22, 0
      %p70 = por %p68, %p69
      %s71 = ssub.s32 %s25, %s34
      %s72 = ssub.s32 %s24, %s38
      %s73 = sor.u32 %s71, %s72
      %p74 = scmp.eq.s32.totalorder %s73, 0
      %s76 = sadd.s32 %s75, 1
      %s77 = scalar_select %p74, %s75, %s76
      %p80 = pneg %p74
      %p81 = scmp.eq.s32.totalorder %s16, 1
      %p82 = por %p80, %p81
      %p83 = scmp.ne.s32.totalorder %s75, %s78
      %p84 = scmp.eq.s32.totalorder %s16, 0
      %p85 = por %p83, %p84
      %p86 = scmp.ne.s32.totalorder %s75, %s78
      %p87 = scmp.eq.s32.totalorder %s21, 1
      %p88 = por %p86, %p87
      %p89 = scmp.ne.s32.totalorder %s78, %s79
      %p90 = scmp.eq.s32.totalorder %s21, 0
      %p91 = por %p89, %p90
      %p92 = scmp.ne.s32.totalorder %s78, %s79
      %p93 = scmp.eq.s32.totalorder %s22, 1
      %p94 = por %p92, %p93
      %p96 = scmp.ne.s32.totalorder %s79, %s95
      %p97 = scmp.eq.s32.totalorder %s22, 0
      %p98 = por %p96, %p97
      %s99 = ssub.s32 %s24, %s38
      %p100 = scmp.eq.s32.totalorder %s99, 0
      %s102 = sadd.s32 %s101, 1
      %s103 = scalar_select %p100, %s101, %s102
      %p106 = pneg %p100
      %p107 = scmp.eq.s32.totalorder %s16, 1
      %p108 = por %p106, %p107
      %p109 = scmp.ne.s32.totalorder %s101, %s104
      %p110 = scmp.eq.s32.totalorder %s16, 0
      %p111 = por %p109, %p110
      %p112 = scmp.ne.s32.totalorder %s101, %s104
      %p113 = scmp.eq.s32.totalorder %s21, 1
      %p114 = por %p112, %p113
      %p115 = scmp.ne.s32.totalorder %s104, %s105
      %p116 = scmp.eq.s32.totalorder %s21, 0
      %p117 = por %p115, %p116
      %p118 = scmp.ne.s32.totalorder %s104, %s105
      %p119 = scmp.eq.s32.totalorder %s22, 1
      %p120 = por %p118, %p119
      %p122 = scmp.ne.s32.totalorder %s105, %s121
      %p123 = scmp.eq.s32.totalorder %s22, 0
      %p124 = por %p122, %p123
      %s125 = ssub.s32 %s23, %s42
      %s126 = ssub.s32 %s24, %s38
      %s127 = sor.u32 %s125, %s126
      %p128 = scmp.eq.s32.totalorder %s127, 0
      %s130 = sadd.s32 %s129, 1
      %s131 = scalar_select %p128, %s129, %s130
      %p134 = pneg %p128
      %p135 = scmp.eq.s32.totalorder %s16, 1
      %p136 = por %p134, %p135
      %p137 = scmp.ne.s32.totalorder %s129, %s132
      %p138 = scmp.eq.s32.totalorder %s16, 0
      %p139 = por %p137, %p138
      %p140 = scmp.ne.s32.totalorder %s129, %s132
      %p141 = scmp.eq.s32.totalorder %s21, 1
      %p142 = por %p140, %p141
      %p143 = scmp.ne.s32.totalorder %s132, %s133
      %p144 = scmp.eq.s32.totalorder %s21, 0
      %p145 = por %p143, %p144
      %p146 = scmp.ne.s32.totalorder %s132, %s133
      %p147 = scmp.eq.s32.totalorder %s22, 1
      %p148 = por %p146, %p147
      %p150 = scmp.ne.s32.totalorder %s133, %s149
      %p151 = scmp.eq.s32.totalorder %s22, 0
      %p152 = por %p150, %p151
      %p153 = scmp.le.s32.totalorder 1, %s16
      %p154 = scmp.lt.s32.totalorder %s16, 3
      %p155 = pnand %p153, %p154
      %p156 = pneg %p155
      // Predicated region
      $region9: #{tpu_custom_call.1} parent=5 // pred_check
        _
      $region10: #{tpu_custom_call.1} parent=5 // pred_check_branch
        %158 = sbr.rel (%p155) target = $region12
      $region11: #{tpu_custom_call.1} parent=5 // pred_region
        %s159 = ssub.s32 %s16, 1
        // Predicated region
        $region13: #{tpu_custom_call.1} parent=11 // pred_check
          %p160 = pneg %p91
        $region14: #{tpu_custom_call.1} parent=11 // pred_check_branch
          %162 = sbr.rel (%p160) target = $region16
        $region15: #{tpu_custom_call.1} parent=11 // pred_region
          %s163 = smul.u32 16, %s28
          %s165 = ssub.s32 1024, 1024
          %166 = vsyncadd [#allocation7], %s165
          %s167 = sadd.s32 %s27, %s163
          %s168 = smul.addr %s167, 64
          %s169 = scalar_lea.hbm %s1, %s168
          %s170 = sshll.u32 [#allocation6], 4
          %s171 = int_to_ptr.vmem [resolvable:$true] %s170
          %176 = dma.hbm_to_vmem [thread:$0]  %s169, 1024, %s171, [#allocation7], 64, 64, 4
        $region16: #{tpu_custom_call.1} parent=11 // pred_fallthru
          _
        // Predicated region
        $region17: #{tpu_custom_call.1} parent=11 // pred_check
          %p177 = pneg %p117
        $region18: #{tpu_custom_call.1} parent=11 // pred_check_branch
          %179 = sbr.rel (%p177) target = $region20
        $region19: #{tpu_custom_call.1} parent=11 // pred_region
          %p180 = scmp.lt.s32.totalorder %s27, 0
          %s181 = scalar_select %p180, %s27, 0
          %s182 = scalar_lea.vmem %s2, %s181
        $region20: #{tpu_custom_call.1} parent=11 // pred_fallthru
          _
      $region12: #{tpu_custom_call.1} parent=5 // pred_fallthru
        _
      %p183 = scmp.lt.s32.totalorder %s16, 2
      // Predicated region
      $region21: #{tpu_custom_call.1} parent=5 // pred_check
        %p184 = pneg %p183
      $region22: #{tpu_custom_call.1} parent=5 // pred_check_branch
        %186 = sbr.rel (%p184) target = $region24
      $region23: #{tpu_custom_call.1} parent=5 // pred_region
        // Predicated region
        $region25: #{tpu_custom_call.1} parent=23 // pred_check
          %p187 = pneg %p57
        $region26: #{tpu_custom_call.1} parent=23 // pred_check_branch
          %189 = sbr.rel (%p187) target = $region28
        $region27: #{tpu_custom_call.1} parent=23 // pred_region
          %s190 = sand.u32 %s47, 1
          %s191 = scalar_lea.sflag [#allocation4], %s190
          %s192 = sand.u32 %s47, 1
          %s193 = smul.addr %s192, 128
          %s194 = scalar_lea.vmem [#allocation3], %s193
          %s195 = smul.u32 32, %s23
          %s197 = ssub.s32 2048, 2048
          %198 = vsyncadd %s191, %s197
          %s199 = sadd.s32 %s25, %s195
          %s200 = smul.addr %s199, 64
          %s201 = scalar_lea.hbm %s0, %s200
          %s202 = sshll.u32 %s194, 4
          %s203 = int_to_ptr.vmem [resolvable:$true] %s202
          %208 = dma.hbm_to_vmem [thread:$0]  %s201, 2048, %s203, %s191, 64, 64, 4
        $region28: #{tpu_custom_call.1} parent=23 // pred_fallthru
          _
      $region24: #{tpu_custom_call.1} parent=5 // pred_fallthru
        _
      %p209 = scmp.le.s32.totalorder 1, %s16
      %p210 = scmp.lt.s32.totalorder %s16, 3
      %p211 = pnand %p209, %p210
      %p212 = pneg %p211
      // Predicated region
      $region29: #{tpu_custom_call.1} parent=5 // pred_check
        _
      $region30: #{tpu_custom_call.1} parent=5 // pred_check_branch
        %214 = sbr.rel (%p211) target = $region32
      $region31: #{tpu_custom_call.1} parent=5 // pred_region
        %s215 = ssub.s32 %s16, 1
        %s216 = sand.u32 %s50, 1
        %s217 = scalar_lea.sflag [#allocation4], %s216
        %s218 = sand.u32 %s50, 1
        %s219 = smul.addr %s218, 128
        %s220 = scalar_lea.vmem [#allocation3], %s219
        // Predicated region
        $region33: #{tpu_custom_call.1} parent=31 // pred_check
          %p221 = pneg %p63
        $region34: #{tpu_custom_call.1} parent=31 // pred_check_branch
          %223 = sbr.rel (%p221) target = $region36
        $region35: #{tpu_custom_call.1} parent=31 // pred_region
          %224 = dma.done %s217, 2048
        $region36: #{tpu_custom_call.1} parent=31 // pred_fallthru
          _
        // Predicated region
        $region37: #{tpu_custom_call.1} parent=31 // pred_check
          %p225 = pneg %p91
        $region38: #{tpu_custom_call.1} parent=31 // pred_check_branch
          %227 = sbr.rel (%p225) target = $region40
        $region39: #{tpu_custom_call.1} parent=31 // pred_region
          %228 = dma.done [#allocation7], 1024
        $region40: #{tpu_custom_call.1} parent=31 // pred_fallthru
          _
        %s229 = sand.u32 %s50, 1
        %s230 = scalar_lea.sflag [#allocation4], %s229
        %s231 = sand.u32 %s50, 1
        %s232 = smul.addr %s231, 128
        %s233 = scalar_lea.vmem [#allocation3], %s232
        %p234 = pneg %p63
        %p235 = pneg %p60
        %p236 = pneg %p91
        %p237 = pneg %p88
        %p238 = scmp.lt.s32.totalorder %s27, 0
        %s239 = scalar_select %p238, %s27, 0
        %s240 = scalar_lea.vmem %s2, %s239
        %p241 = pneg %p117
        %p242 = pneg %p114
        %p243 = pneg %p145
        %p244 = pneg %p142
        %s245 = sand.u32 %s132, 1
        %s246 = scalar_lea.sflag [#allocation5], %s245
        %s247 = sand.u32 %s132, 1
        %s248 = smul.addr %s247, 128
        %s249 = scalar_lea.vmem [#allocation8], %s248
        %s250 = smul.u32 32, %s26
        %s251 = smul.u32 16, %s28
        %p252 = scmp.lt.s32.totalorder %s27, 0
        %s253 = scalar_select %p252, %s27, 0
        %s254 = scalar_lea.vmem %s2, %s253
        %s255 = smul.u32 32, %s26
        %p257 = scmp.eq.s32.totalorder %s28, 0
        // Predicated region
        $region41: #{tpu_custom_call.1} parent=31 // pred_check
          %p258 = pneg %p257
        $region42: #{tpu_custom_call.1} parent=31 // pred_check_branch
          %260 = sbr.rel (%p258) target = $region44
        $region43: #{tpu_custom_call.1} parent=31 // pred_region
          %261 = vst [vmem:[#allocation2] sm:$0xff] 0.0
          %262 = vst [vmem:[#allocation2 + $0x8] sm:$0xff] 0.0
          %263 = vst [vmem:[#allocation2 + $0x10] sm:$0xff] 0.0
          %264 = vst [vmem:[#allocation2 + $0x18] sm:$0xff] 0.0
          %265 = vst [vmem:[#allocation2 + $0x20] sm:$0xff] 0.0
          %266 = vst [vmem:[#allocation2 + $0x28] sm:$0xff] 0.0
          %267 = vst [vmem:[#allocation2 + $0x30] sm:$0xff] 0.0
          %268 = vst [vmem:[#allocation2 + $0x38] sm:$0xff] 0.0
          %269 = vst [vmem:[#allocation2 + $0x40] sm:$0xff] 0.0
          %270 = vst [vmem:[#allocation2 + $0x48] sm:$0xff] 0.0
          %271 = vst [vmem:[#allocation2 + $0x50] sm:$0xff] 0.0
          %272 = vst [vmem:[#allocation2 + $0x58] sm:$0xff] 0.0
          %273 = vst [vmem:[#allocation2 + $0x60] sm:$0xff] 0.0
          %274 = vst [vmem:[#allocation2 + $0x68] sm:$0xff] 0.0
          %275 = vst [vmem:[#allocation2 + $0x70] sm:$0xff] 0.0
          %276 = vst [vmem:[#allocation2 + $0x78] sm:$0xff] 0.0
          %277 = vst [vmem:[#allocation2 + $0x80] sm:$0xff] 0.0
          %278 = vst [vmem:[#allocation2 + $0x88] sm:$0xff] 0.0
          %279 = vst [vmem:[#allocation2 + $0x90] sm:$0xff] 0.0
          %280 = vst [vmem:[#allocation2 + $0x98] sm:$0xff] 0.0
          %281 = vst [vmem:[#allocation2 + $0xa0] sm:$0xff] 0.0
          %282 = vst [vmem:[#allocation2 + $0xa8] sm:$0xff] 0.0
          %283 = vst [vmem:[#allocation2 + $0xb0] sm:$0xff] 0.0
          %284 = vst [vmem:[#allocation2 + $0xb8] sm:$0xff] 0.0
          %285 = vst [vmem:[#allocation2 + $0xc0] sm:$0xff] 0.0
          %286 = vst [vmem:[#allocation2 + $0xc8] sm:$0xff] 0.0
          %287 = vst [vmem:[#allocation2 + $0xd0] sm:$0xff] 0.0
          %288 = vst [vmem:[#allocation2 + $0xd8] sm:$0xff] 0.0
          %289 = vst [vmem:[#allocation2 + $0xe0] sm:$0xff] 0.0
          %290 = vst [vmem:[#allocation2 + $0xe8] sm:$0xff] 0.0
          %291 = vst [vmem:[#allocation2 + $0xf0] sm:$0xff] 0.0
          %292 = vst [vmem:[#allocation2 + $0xf8] sm:$0xff] 0.0
        $region44: #{tpu_custom_call.1} parent=31 // pred_fallthru
          _
        %v293 = vld [vmem:[#allocation2] sm:$0xff]
        %v294 = vld [vmem:[#allocation2 + $0x8] sm:$0xff]
        %v295 = vld [vmem:[#allocation2 + $0x10] sm:$0xff]
        %v296 = vld [vmem:[#allocation2 + $0x18] sm:$0xff]
        %v297 = vld [vmem:[#allocation2 + $0x20] sm:$0xff]
        %v298 = vld [vmem:[#allocation2 + $0x28] sm:$0xff]
        %v299 = vld [vmem:[#allocation2 + $0x30] sm:$0xff]
        %v300 = vld [vmem:[#allocation2 + $0x38] sm:$0xff]
        %v301 = vld [vmem:[#allocation2 + $0x40] sm:$0xff]
        %v302 = vld [vmem:[#allocation2 + $0x48] sm:$0xff]
        %v303 = vld [vmem:[#allocation2 + $0x50] sm:$0xff]
        %v304 = vld [vmem:[#allocation2 + $0x58] sm:$0xff]
        %v305 = vld [vmem:[#allocation2 + $0x60] sm:$0xff]
        %v306 = vld [vmem:[#allocation2 + $0x68] sm:$0xff]
        %v307 = vld [vmem:[#allocation2 + $0x70] sm:$0xff]
        %v308 = vld [vmem:[#allocation2 + $0x78] sm:$0xff]
        %v309 = vld [vmem:[#allocation2 + $0x80] sm:$0xff]
        %v310 = vld [vmem:[#allocation2 + $0x88] sm:$0xff]
        %v311 = vld [vmem:[#allocation2 + $0x90] sm:$0xff]
        %v312 = vld [vmem:[#allocation2 + $0x98] sm:$0xff]
        %v313 = vld [vmem:[#allocation2 + $0xa0] sm:$0xff]
        %v314 = vld [vmem:[#allocation2 + $0xa8] sm:$0xff]
        %v315 = vld [vmem:[#allocation2 + $0xb0] sm:$0xff]
        %v316 = vld [vmem:[#allocation2 + $0xb8] sm:$0xff]
        %v317 = vld [vmem:[#allocation2 + $0xc0] sm:$0xff]
        %v318 = vld [vmem:[#allocation2 + $0xc8] sm:$0xff]
        %v319 = vld [vmem:[#allocation2 + $0xd0] sm:$0xff]
        %v320 = vld [vmem:[#allocation2 + $0xd8] sm:$0xff]
        %v321 = vld [vmem:[#allocation2 + $0xe0] sm:$0xff]
        %v322 = vld [vmem:[#allocation2 + $0xe8] sm:$0xff]
        %v323 = vld [vmem:[#allocation2 + $0xf0] sm:$0xff]
        %v324 = vld [vmem:[#allocation2 + $0xf8] sm:$0xff]
        %v325 = vld [vmem:[%s220] sm:$0xf]
        %v326 = vld [vmem:[%s220 + $0x4] sm:$0xf]
        %v327 = vld [vmem:[%s220 + $0x8] sm:$0xf]
        %v328 = vld [vmem:[%s220 + $0xc] sm:$0xf]
        %v329 = vld [vmem:[%s220 + $0x10] sm:$0xf]
        %v330 = vld [vmem:[%s220 + $0x14] sm:$0xf]
        %v331 = vld [vmem:[%s220 + $0x18] sm:$0xf]
        %v332 = vld [vmem:[%s220 + $0x1c] sm:$0xf]
        %v333 = vld [vmem:[%s220 + $0x20] sm:$0xf]
        %v334 = vld [vmem:[%s220 + $0x24] sm:$0xf]
        %v335 = vld [vmem:[%s220 + $0x28] sm:$0xf]
        %v336 = vld [vmem:[%s220 + $0x2c] sm:$0xf]
        %v337 = vld [vmem:[%s220 + $0x30] sm:$0xf]
        %v338 = vld [vmem:[%s220 + $0x34] sm:$0xf]
        %v339 = vld [vmem:[%s220 + $0x38] sm:$0xf]
        %v340 = vld [vmem:[%s220 + $0x3c] sm:$0xf]
        %v341 = vld [vmem:[%s220 + $0x40] sm:$0xf]
        %v342 = vld [vmem:[%s220 + $0x44] sm:$0xf]
        %v343 = vld [vmem:[%s220 + $0x48] sm:$0xf]
        %v344 = vld [vmem:[%s220 + $0x4c] sm:$0xf]
        %v345 = vld [vmem:[%s220 + $0x50] sm:$0xf]
        %v346 = vld [vmem:[%s220 + $0x54] sm:$0xf]
        %v347 = vld [vmem:[%s220 + $0x58] sm:$0xf]
        %v348 = vld [vmem:[%s220 + $0x5c] sm:$0xf]
        %v349 = vld [vmem:[%s220 + $0x60] sm:$0xf]
        %v350 = vld [vmem:[%s220 + $0x64] sm:$0xf]
        %v351 = vld [vmem:[%s220 + $0x68] sm:$0xf]
        %v352 = vld [vmem:[%s220 + $0x6c] sm:$0xf]
        %v353 = vld [vmem:[%s220 + $0x70] sm:$0xf]
        %v354 = vld [vmem:[%s220 + $0x74] sm:$0xf]
        %v355 = vld [vmem:[%s220 + $0x78] sm:$0xf]
        %v356 = vld [vmem:[%s220 + $0x7c] sm:$0xf]
        %v357 = vld [vmem:[#allocation6] sm:$0xf]
        %v358 = vld [vmem:[#allocation6 + $0x4] sm:$0xf]
        %v359 = vld [vmem:[#allocation6 + $0x8] sm:$0xf]
        %v360 = vld [vmem:[#allocation6 + $0xc] sm:$0xf]
        %v361 = vld [vmem:[#allocation6 + $0x10] sm:$0xf]
        %v362 = vld [vmem:[#allocation6 + $0x14] sm:$0xf]
        %v363 = vld [vmem:[#allocation6 + $0x18] sm:$0xf]
        %v364 = vld [vmem:[#allocation6 + $0x1c] sm:$0xf]
        %v365 = vld [vmem:[#allocation6 + $0x20] sm:$0xf]
        %v366 = vld [vmem:[#allocation6 + $0x24] sm:$0xf]
        %v367 = vld [vmem:[#allocation6 + $0x28] sm:$0xf]
        %v368 = vld [vmem:[#allocation6 + $0x2c] sm:$0xf]
        %v369 = vld [vmem:[#allocation6 + $0x30] sm:$0xf]
        %v370 = vld [vmem:[#allocation6 + $0x34] sm:$0xf]
        %v371 = vld [vmem:[#allocation6 + $0x38] sm:$0xf]
        %v372 = vld [vmem:[#allocation6 + $0x3c] sm:$0xf]
        %v405 = vunpack.c.l.b16 %v325
        %v406 = vunpack.c.l.b16 %v326
        %v407 = vunpack.c.l.b16 %v327
        %v408 = vunpack.c.l.b16 %v328
        %v409 = vunpack.c.l.b16 %v329
        %v410 = vunpack.c.l.b16 %v330
        %v411 = vunpack.c.l.b16 %v331
        %v412 = vunpack.c.l.b16 %v332
        %v413 = vunpack.c.l.b16 %v333
        %v414 = vunpack.c.l.b16 %v334
        %v415 = vunpack.c.l.b16 %v335
        %v416 = vunpack.c.l.b16 %v336
        %v417 = vunpack.c.l.b16 %v337
        %v418 = vunpack.c.l.b16 %v338
        %v419 = vunpack.c.l.b16 %v339
        %v420 = vunpack.c.l.b16 %v340
        %v421 = vunpack.c.l.b16 %v341
        %v422 = vunpack.c.l.b16 %v342
        %v423 = vunpack.c.l.b16 %v343
        %v424 = vunpack.c.l.b16 %v344
        %v425 = vunpack.c.l.b16 %v345
        %v426 = vunpack.c.l.b16 %v346
        %v427 = vunpack.c.l.b16 %v347
        %v428 = vunpack.c.l.b16 %v348
        %v429 = vunpack.c.l.b16 %v349
        %v430 = vunpack.c.l.b16 %v350
        %v431 = vunpack.c.l.b16 %v351
        %v432 = vunpack.c.l.b16 %v352
        %v433 = vunpack.c.l.b16 %v353
        %v434 = vunpack.c.l.b16 %v354
        %v435 = vunpack.c.l.b16 %v355
        %v436 = vunpack.c.l.b16 %v356
        %v437 = vpack.c.b16 %v406, %v405
        %v438 = vpack.c.b16 %v408, %v407
        %v439 = vpack.c.b16 %v410, %v409
        %v440 = vpack.c.b16 %v412, %v411
        %v441 = vpack.c.b16 %v414, %v413
        %v442 = vpack.c.b16 %v416, %v415
        %v443 = vpack.c.b16 %v418, %v417
        %v444 = vpack.c.b16 %v420, %v419
        %v445 = vpack.c.b16 %v422, %v421
        %v446 = vpack.c.b16 %v424, %v423
        %v447 = vpack.c.b16 %v426, %v425
        %v448 = vpack.c.b16 %v428, %v427
        %v449 = vpack.c.b16 %v430, %v429
        %v450 = vpack.c.b16 %v432, %v431
        %v451 = vpack.c.b16 %v434, %v433
        %v452 = vpack.c.b16 %v436, %v435
        %v485 = vunpack.c.l.b16 %v357
        %v486 = vunpack.c.l.b16 %v358
        %v487 = vunpack.c.l.b16 %v359
        %v488 = vunpack.c.l.b16 %v360
        %v489 = vunpack.c.l.b16 %v361
        %v490 = vunpack.c.l.b16 %v362
        %v491 = vunpack.c.l.b16 %v363
        %v492 = vunpack.c.l.b16 %v364
        %v493 = vunpack.c.l.b16 %v365
        %v494 = vunpack.c.l.b16 %v366
        %v495 = vunpack.c.l.b16 %v367
        %v496 = vunpack.c.l.b16 %v368
        %v497 = vunpack.c.l.b16 %v369
        %v498 = vunpack.c.l.b16 %v370
        %v499 = vunpack.c.l.b16 %v371
        %v500 = vunpack.c.l.b16 %v372
        %v501 = vpack.c.b16 %v486, %v485
        %v502 = vpack.c.b16 %v488, %v487
        %v503 = vpack.c.b16 %v490, %v489
        %v504 = vpack.c.b16 %v492, %v491
        %v505 = vpack.c.b16 %v494, %v493
        %v506 = vpack.c.b16 %v496, %v495
        %v507 = vpack.c.b16 %v498, %v497
        %v508 = vpack.c.b16 %v500, %v499
        %517 = vmatprep.subr.bf16.mxu0 0
        %518 = vmatpush1.bf16.msra.mxu0 %v501
        %519 = vmatprep.subr.bf16.mxu0 0
        %520 = vmatpush1.bf16.msra.mxu0 %v502
        %521 = vmatprep.subr.bf16.mxu0 0
        %522 = vmatpush1.bf16.msra.mxu0 %v503
        %523 = vmatprep.subr.bf16.mxu0 0
        %524 = vmatpush1.bf16.msra.mxu0 %v504
        %525 = vmatprep.subr.bf16.mxu0 0
        %526 = vmatpush1.bf16.msra.mxu0 %v505
        %527 = vmatprep.subr.bf16.mxu0 0
        %528 = vmatpush1.bf16.msra.mxu0 %v506
        %529 = vmatprep.subr.bf16.mxu0 0
        %530 = vmatpush1.bf16.msra.mxu0 %v507
        %531 = vmatprep.subr.bf16.mxu0 0
        %532 = vmatpush1.bf16.msra.mxu0 %v508
        %533 = vmatprep.subr.bf16.mxu0 0
        %534 = vmatpush1.bf16.msra.mxu0 0
        %535 = vmatprep.subr.bf16.mxu0 0
        %536 = vmatpush1.bf16.msra.mxu0 0
        %537 = vmatprep.subr.bf16.mxu0 0
        %538 = vmatpush1.bf16.msra.mxu0 0
        %539 = vmatprep.subr.bf16.mxu0 0
        %540 = vmatpush1.bf16.msra.mxu0 0
        %541 = vmatprep.subr.bf16.mxu0 0
        %542 = vmatpush1.bf16.msra.mxu0 0
        %543 = vmatprep.subr.bf16.mxu0 0
        %544 = vmatpush1.bf16.msra.mxu0 0
        %545 = vmatprep.subr.bf16.mxu0 0
        %546 = vmatpush1.bf16.msra.mxu0 0
        %547 = vmatprep.subr.bf16.mxu0 0
        %548 = vmatpush1.bf16.msra.mxu0 0
        %549 = vmatprep.mubr.bf16.mxu0 0
        %550 = vmatmul.mubr.bf16.gmra.mrb[0].mxu0 %v437
        %v551 = vpop.f32.mrb[0].mxu0
        %v552 = vadd.f32 0.0, %v551
        %v553 = vpop.f32.mrb[0].mxu0
        %v554 = vpop.f32.mrb[0].mxu0
        %v555 = vadd.f32 0.0, %v554
        %v556 = vpop.f32.mrb[0].mxu0
        %557 = vmatprep.mubr.bf16.mxu0 0
        %558 = vmatmul.mubr.bf16.gmra.mrb[0].mxu0 %v438
        %v559 = vpop.f32.mrb[0].mxu0
        %v560 = vadd.f32 0.0, %v559
        %v561 = vpop.f32.mrb[0].mxu0
        %v562 = vpop.f32.mrb[0].mxu0
        %v563 = vadd.f32 0.0, %v562
        %v564 = vpop.f32.mrb[0].mxu0
        %565 = vmatprep.mubr.bf16.mxu0 0
        %566 = vmatmul.mubr.bf16.gmra.mrb[0].mxu0 %v439
        %v567 = vpop.f32.mrb[0].mxu0
        %v568 = vadd.f32 0.0, %v567
        %v569 = vpop.f32.mrb[0].mxu0
        %v570 = vpop.f32.mrb[0].mxu0
        %v571 = vadd.f32 0.0, %v570
        %v572 = vpop.f32.mrb[0].mxu0
        %573 = vmatprep.mubr.bf16.mxu0 0
        %574 = vmatmul.mubr.bf16.gmra.mrb[0].mxu0 %v440
        %v575 = vpop.f32.mrb[0].mxu0
        %v576 = vadd.f32 0.0, %v575
        %v577 = vpop.f32.mrb[0].mxu0
        %v578 = vpop.f32.mrb[0].mxu0
        %v579 = vadd.f32 0.0, %v578
        %v580 = vpop.f32.mrb[0].mxu0
        %581 = vmatprep.mubr.bf16.mxu0 0
        %582 = vmatmul.mubr.bf16.gmra.mrb[0].mxu0 %v441
        %v583 = vpop.f32.mrb[0].mxu0
        %v584 = vadd.f32 0.0, %v583
        %v585 = vpop.f32.mrb[0].mxu0
        %v586 = vpop.f32.mrb[0].mxu0
        %v587 = vadd.f32 0.0, %v586
        %v588 = vpop.f32.mrb[0].mxu0
        %589 = vmatprep.mubr.bf16.mxu0 0
        %590 = vmatmul.mubr.bf16.gmra.mrb[0].mxu0 %v442
        %v591 = vpop.f32.mrb[0].mxu0
        %v592 = vadd.f32 0.0, %v591
        %v593 = vpop.f32.mrb[0].mxu0
        %v594 = vpop.f32.mrb[0].mxu0
        %v595 = vadd.f32 0.0, %v594
        %v596 = vpop.f32.mrb[0].mxu0
        %597 = vmatprep.mubr.bf16.mxu0 0
        %598 = vmatmul.mubr.bf16.gmra.mrb[0].mxu0 %v443
        %v599 = vpop.f32.mrb[0].mxu0
        %v600 = vadd.f32 0.0, %v599
        %v601 = vpop.f32.mrb[0].mxu0
        %v602 = vpop.f32.mrb[0].mxu0
        %v603 = vadd.f32 0.0, %v602
        %v604 = vpop.f32.mrb[0].mxu0
        %605 = vmatprep.mubr.bf16.mxu0 0
        %606 = vmatmul.mubr.bf16.gmra.mrb[0].mxu0 %v444
        %v607 = vpop.f32.mrb[0].mxu0
        %v608 = vadd.f32 0.0, %v607
        %v609 = vpop.f32.mrb[0].mxu0
        %v610 = vpop.f32.mrb[0].mxu0
        %v611 = vadd.f32 0.0, %v610
        %v612 = vpop.f32.mrb[0].mxu0
        %613 = vmatprep.mubr.bf16.mxu0 0
        %614 = vmatmul.mubr.bf16.gmra.mrb[0].mxu0 %v445
        %v615 = vpop.f32.mrb[0].mxu0
        %v616 = vadd.f32 0.0, %v615
        %v617 = vpop.f32.mrb[0].mxu0
        %v618 = vpop.f32.mrb[0].mxu0
        %v619 = vadd.f32 0.0, %v618
        %v620 = vpop.f32.mrb[0].mxu0
        %621 = vmatprep.mubr.bf16.mxu0 0
        %622 = vmatmul.mubr.bf16.gmra.mrb[0].mxu0 %v446
        %v623 = vpop.f32.mrb[0].mxu0
        %v624 = vadd.f32 0.0, %v623
        %v625 = vpop.f32.mrb[0].mxu0
        %v626 = vpop.f32.mrb[0].mxu0
        %v627 = vadd.f32 0.0, %v626
        %v628 = vpop.f32.mrb[0].mxu0
        %629 = vmatprep.mubr.bf16.mxu0 0
        %630 = vmatmul.mubr.bf16.gmra.mrb[0].mxu0 %v447
        %v631 = vpop.f32.mrb[0].mxu0
        %v632 = vadd.f32 0.0, %v631
        %v633 = vpop.f32.mrb[0].mxu0
        %v634 = vpop.f32.mrb[0].mxu0
        %v635 = vadd.f32 0.0, %v634
        %v636 = vpop.f32.mrb[0].mxu0
        %637 = vmatprep.mubr.bf16.mxu0 0
        %638 = vmatmul.mubr.bf16.gmra.mrb[0].mxu0 %v448
        %v639 = vpop.f32.mrb[0].mxu0
        %v640 = vadd.f32 0.0, %v639
        %v641 = vpop.f32.mrb[0].mxu0
        %v642 = vpop.f32.mrb[0].mxu0
        %v643 = vadd.f32 0.0, %v642
        %v644 = vpop.f32.mrb[0].mxu0
        %645 = vmatprep.mubr.bf16.mxu0 0
        %646 = vmatmul.mubr.bf16.gmra.mrb[0].mxu0 %v449
        %v647 = vpop.f32.mrb[0].mxu0
        %v648 = vadd.f32 0.0, %v647
        %v649 = vpop.f32.mrb[0].mxu0
        %v650 = vpop.f32.mrb[0].mxu0
        %v651 = vadd.f32 0.0, %v650
        %v652 = vpop.f32.mrb[0].mxu0
        %653 = vmatprep.mubr.bf16.mxu0 0
        %654 = vmatmul.mubr.bf16.gmra.mrb[0].mxu0 %v450
        %v655 = vpop.f32.mrb[0].mxu0
        %v656 = vadd.f32 0.0, %v655
        %v657 = vpop.f32.mrb[0].mxu0
        %v658 = vpop.f32.mrb[0].mxu0
        %v659 = vadd.f32 0.0, %v658
        %v660 = vpop.f32.mrb[0].mxu0
        %661 = vmatprep.mubr.bf16.mxu0 0
        %662 = vmatmul.mubr.bf16.gmra.mrb[0].mxu0 %v451
        %v663 = vpop.f32.mrb[0].mxu0
        %v664 = vadd.f32 0.0, %v663
        %v665 = vpop.f32.mrb[0].mxu0
        %v666 = vpop.f32.mrb[0].mxu0
        %v667 = vadd.f32 0.0, %v666
        %v668 = vpop.f32.mrb[0].mxu0
        %669 = vmatprep.mubr.bf16.mxu0 0
        %670 = vmatmul.mubr.bf16.gmra.mrb[0].mxu0 %v452
        %v671 = vpop.f32.mrb[0].mxu0
        %v672 = vadd.f32 0.0, %v671
        %v673 = vpop.f32.mrb[0].mxu0
        %v674 = vpop.f32.mrb[0].mxu0
        %v675 = vadd.f32 0.0, %v674
        %v676 = vpop.f32.mrb[0].mxu0
        %677 = vdwg.mxu0
        %v678 = vadd.f32 %v293, %v552
        %v679 = vadd.f32 %v294, %v555
        %v680 = vadd.f32 %v295, %v560
        %v681 = vadd.f32 %v296, %v563
        %v682 = vadd.f32 %v297, %v568
        %v683 = vadd.f32 %v298, %v571
        %v684 = vadd.f32 %v299, %v576
        %v685 = vadd.f32 %v300, %v579
        %v686 = vadd.f32 %v301, %v584
        %v687 = vadd.f32 %v302, %v587
        %v688 = vadd.f32 %v303, %v592
        %v689 = vadd.f32 %v304, %v595
        %v690 = vadd.f32 %v305, %v600
        %v691 = vadd.f32 %v306, %v603
        %v692 = vadd.f32 %v307, %v608
        %v693 = vadd.f32 %v308, %v611
        %v694 = vadd.f32 %v309, %v616
        %v695 = vadd.f32 %v310, %v619
        %v696 = vadd.f32 %v311, %v624
        %v697 = vadd.f32 %v312, %v627
        %v698 = vadd.f32 %v313, %v632
        %v699 = vadd.f32 %v314, %v635
        %v700 = vadd.f32 %v315, %v640
        %v701 = vadd.f32 %v316, %v643
        %v702 = vadd.f32 %v317, %v648
        %v703 = vadd.f32 %v318, %v651
        %v704 = vadd.f32 %v319, %v656
        %v705 = vadd.f32 %v320, %v659
        %v706 = vadd.f32 %v321, %v664
        %v707 = vadd.f32 %v322, %v667
        %v708 = vadd.f32 %v323, %v672
        %v709 = vadd.f32 %v324, %v675
        %710 = vst [vmem:[#allocation2] sm:$0xff] %v678
        %711 = vst [vmem:[#allocation2 + $0x8] sm:$0xff] %v679
        %712 = vst [vmem:[#allocation2 + $0x10] sm:$0xff] %v680
        %713 = vst [vmem:[#allocation2 + $0x18] sm:$0xff] %v681
        %714 = vst [vmem:[#allocation2 + $0x20] sm:$0xff] %v682
        %715 = vst [vmem:[#allocation2 + $0x28] sm:$0xff] %v683
        %716 = vst [vmem:[#allocation2 + $0x30] sm:$0xff] %v684
        %717 = vst [vmem:[#allocation2 + $0x38] sm:$0xff] %v685
        %718 = vst [vmem:[#allocation2 + $0x40] sm:$0xff] %v686
        %719 = vst [vmem:[#allocation2 + $0x48] sm:$0xff] %v687
        %720 = vst [vmem:[#allocation2 + $0x50] sm:$0xff] %v688
        %721 = vst [vmem:[#allocation2 + $0x58] sm:$0xff] %v689
        %722 = vst [vmem:[#allocation2 + $0x60] sm:$0xff] %v690
        %723 = vst [vmem:[#allocation2 + $0x68] sm:$0xff] %v691
        %724 = vst [vmem:[#allocation2 + $0x70] sm:$0xff] %v692
        %725 = vst [vmem:[#allocation2 + $0x78] sm:$0xff] %v693
        %726 = vst [vmem:[#allocation2 + $0x80] sm:$0xff] %v694
        %727 = vst [vmem:[#allocation2 + $0x88] sm:$0xff] %v695
        %728 = vst [vmem:[#allocation2 + $0x90] sm:$0xff] %v696
        %729 = vst [vmem:[#allocation2 + $0x98] sm:$0xff] %v697
        %730 = vst [vmem:[#allocation2 + $0xa0] sm:$0xff] %v698
        %731 = vst [vmem:[#allocation2 + $0xa8] sm:$0xff] %v699
        %732 = vst [vmem:[#allocation2 + $0xb0] sm:$0xff] %v700
        %733 = vst [vmem:[#allocation2 + $0xb8] sm:$0xff] %v701
        %734 = vst [vmem:[#allocation2 + $0xc0] sm:$0xff] %v702
        %735 = vst [vmem:[#allocation2 + $0xc8] sm:$0xff] %v703
        %736 = vst [vmem:[#allocation2 + $0xd0] sm:$0xff] %v704
        %737 = vst [vmem:[#allocation2 + $0xd8] sm:$0xff] %v705
        %738 = vst [vmem:[#allocation2 + $0xe0] sm:$0xff] %v706
        %739 = vst [vmem:[#allocation2 + $0xe8] sm:$0xff] %v707
        %740 = vst [vmem:[#allocation2 + $0xf0] sm:$0xff] %v708
        %741 = vst [vmem:[#allocation2 + $0xf8] sm:$0xff] %v709
        // Predicated region
        $region45: #{tpu_custom_call.1} parent=31 // pred_check
          %p742 = pneg %p257
        $region46: #{tpu_custom_call.1} parent=31 // pred_check_branch
          %744 = sbr.rel (%p742) target = $region48
        $region47: #{tpu_custom_call.1} parent=31 // pred_region
          %v745 = vld [vmem:[#allocation2] sm:$0xff]
          %v746 = vld [vmem:[#allocation2 + $0x8] sm:$0xff]
          %v747 = vld [vmem:[#allocation2 + $0x10] sm:$0xff]
          %v748 = vld [vmem:[#allocation2 + $0x18] sm:$0xff]
          %v749 = vld [vmem:[#allocation2 + $0x20] sm:$0xff]
          %v750 = vld [vmem:[#allocation2 + $0x28] sm:$0xff]
          %v751 = vld [vmem:[#allocation2 + $0x30] sm:$0xff]
          %v752 = vld [vmem:[#allocation2 + $0x38] sm:$0xff]
          %v753 = vld [vmem:[#allocation2 + $0x40] sm:$0xff]
          %v754 = vld [vmem:[#allocation2 + $0x48] sm:$0xff]
          %v755 = vld [vmem:[#allocation2 + $0x50] sm:$0xff]
          %v756 = vld [vmem:[#allocation2 + $0x58] sm:$0xff]
          %v757 = vld [vmem:[#allocation2 + $0x60] sm:$0xff]
          %v758 = vld [vmem:[#allocation2 + $0x68] sm:$0xff]
          %v759 = vld [vmem:[#allocation2 + $0x70] sm:$0xff]
          %v760 = vld [vmem:[#allocation2 + $0x78] sm:$0xff]
          %v761 = vld [vmem:[#allocation2 + $0x80] sm:$0xff]
          %v762 = vld [vmem:[#allocation2 + $0x88] sm:$0xff]
          %v763 = vld [vmem:[#allocation2 + $0x90] sm:$0xff]
          %v764 = vld [vmem:[#allocation2 + $0x98] sm:$0xff]
          %v765 = vld [vmem:[#allocation2 + $0xa0] sm:$0xff]
          %v766 = vld [vmem:[#allocation2 + $0xa8] sm:$0xff]
          %v767 = vld [vmem:[#allocation2 + $0xb0] sm:$0xff]
          %v768 = vld [vmem:[#allocation2 + $0xb8] sm:$0xff]
          %v769 = vld [vmem:[#allocation2 + $0xc0] sm:$0xff]
          %v770 = vld [vmem:[#allocation2 + $0xc8] sm:$0xff]
          %v771 = vld [vmem:[#allocation2 + $0xd0] sm:$0xff]
          %v772 = vld [vmem:[#allocation2 + $0xd8] sm:$0xff]
          %v773 = vld [vmem:[#allocation2 + $0xe0] sm:$0xff]
          %v774 = vld [vmem:[#allocation2 + $0xe8] sm:$0xff]
          %v775 = vld [vmem:[#allocation2 + $0xf0] sm:$0xff]
          %v776 = vld [vmem:[#allocation2 + $0xf8] sm:$0xff]
          %v777 = vld [vmem:[%s254] sm:$0x1]
          %v779 = vlaneseq
          %v780 = vshrl.u32 %v779, 7
          %v781 = vsub.s32 0, %v780
          %v782 = vrot.slane %v777, %v781
          %v784 = vadd.f32 %v745, %v782
          %v785 = vadd.f32 %v746, %v782
          %v786 = vadd.f32 %v747, %v782
          %v787 = vadd.f32 %v748, %v782
          %v788 = vadd.f32 %v749, %v782
          %v789 = vadd.f32 %v750, %v782
          %v790 = vadd.f32 %v751, %v782
          %v791 = vadd.f32 %v752, %v782
          %v792 = vadd.f32 %v753, %v782
          %v793 = vadd.f32 %v754, %v782
          %v794 = vadd.f32 %v755, %v782
          %v795 = vadd.f32 %v756, %v782
          %v796 = vadd.f32 %v757, %v782
          %v797 = vadd.f32 %v758, %v782
          %v798 = vadd.f32 %v759, %v782
          %v799 = vadd.f32 %v760, %v782
          %v800 = vadd.f32 %v761, %v782
          %v801 = vadd.f32 %v762, %v782
          %v802 = vadd.f32 %v763, %v782
          %v803 = vadd.f32 %v764, %v782
          %v804 = vadd.f32 %v765, %v782
          %v805 = vadd.f32 %v766, %v782
          %v806 = vadd.f32 %v767, %v782
          %v807 = vadd.f32 %v768, %v782
          %v808 = vadd.f32 %v769, %v782
          %v809 = vadd.f32 %v770, %v782
          %v810 = vadd.f32 %v771, %v782
          %v811 = vadd.f32 %v772, %v782
          %v812 = vadd.f32 %v773, %v782
          %v813 = vadd.f32 %v774, %v782
          %v814 = vadd.f32 %v775, %v782
          %v815 = vadd.f32 %v776, %v782
          %v816 = vmax.f32 %v784, 0.0
          %v817 = vmax.f32 %v785, 0.0
          %v818 = vmax.f32 %v786, 0.0
          %v819 = vmax.f32 %v787, 0.0
          %v820 = vmax.f32 %v788, 0.0
          %v821 = vmax.f32 %v789, 0.0
          %v822 = vmax.f32 %v790, 0.0
          %v823 = vmax.f32 %v791, 0.0
          %v824 = vmax.f32 %v792, 0.0
          %v825 = vmax.f32 %v793, 0.0
          %v826 = vmax.f32 %v794, 0.0
          %v827 = vmax.f32 %v795, 0.0
          %v828 = vmax.f32 %v796, 0.0
          %v829 = vmax.f32 %v797, 0.0
          %v830 = vmax.f32 %v798, 0.0
          %v831 = vmax.f32 %v799, 0.0
          %v832 = vmax.f32 %v800, 0.0
          %v833 = vmax.f32 %v801, 0.0
          %v834 = vmax.f32 %v802, 0.0
          %v835 = vmax.f32 %v803, 0.0
          %v836 = vmax.f32 %v804, 0.0
          %v837 = vmax.f32 %v805, 0.0
          %v838 = vmax.f32 %v806, 0.0
          %v839 = vmax.f32 %v807, 0.0
          %v840 = vmax.f32 %v808, 0.0
          %v841 = vmax.f32 %v809, 0.0
          %v842 = vmax.f32 %v810, 0.0
          %v843 = vmax.f32 %v811, 0.0
          %v844 = vmax.f32 %v812, 0.0
          %v845 = vmax.f32 %v813, 0.0
          %v846 = vmax.f32 %v814, 0.0
          %v847 = vmax.f32 %v815, 0.0
          %v848 = vpack.c.bf16 %v817, %v816
          %v849 = vpack.c.bf16 %v819, %v818
          %v850 = vpack.c.bf16 %v821, %v820
          %v851 = vpack.c.bf16 %v823, %v822
          %v852 = vpack.c.bf16 %v825, %v824
          %v853 = vpack.c.bf16 %v827, %v826
          %v854 = vpack.c.bf16 %v829, %v828
          %v855 = vpack.c.bf16 %v831, %v830
          %v856 = vpack.c.bf16 %v833, %v832
          %v857 = vpack.c.bf16 %v835, %v834
          %v858 = vpack.c.bf16 %v837, %v836
          %v859 = vpack.c.bf16 %v839, %v838
          %v860 = vpack.c.bf16 %v841, %v840
          %v861 = vpack.c.bf16 %v843, %v842
          %v862 = vpack.c.bf16 %v845, %v844
          %v863 = vpack.c.bf16 %v847, %v846
          %v880 = vunpack.c.l.b16 %v848
          %v881 = vunpack.c.h.b16 %v848
          %v882 = vunpack.c.l.b16 %v849
          %v883 = vunpack.c.h.b16 %v849
          %v884 = vunpack.c.l.b16 %v850
          %v885 = vunpack.c.h.b16 %v850
          %v886 = vunpack.c.l.b16 %v851
          %v887 = vunpack.c.h.b16 %v851
          %v888 = vunpack.c.l.b16 %v852
          %v889 = vunpack.c.h.b16 %v852
          %v890 = vunpack.c.l.b16 %v853
          %v891 = vunpack.c.h.b16 %v853
          %v892 = vunpack.c.l.b16 %v854
          %v893 = vunpack.c.h.b16 %v854
          %v894 = vunpack.c.l.b16 %v855
          %v895 = vunpack.c.h.b16 %v855
          %v896 = vunpack.c.l.b16 %v856
          %v897 = vunpack.c.h.b16 %v856
          %v898 = vunpack.c.l.b16 %v857
          %v899 = vunpack.c.h.b16 %v857
          %v900 = vunpack.c.l.b16 %v858
          %v901 = vunpack.c.h.b16 %v858
          %v902 = vunpack.c.l.b16 %v859
          %v903 = vunpack.c.h.b16 %v859
          %v904 = vunpack.c.l.b16 %v860
          %v905 = vunpack.c.h.b16 %v860
          %v906 = vunpack.c.l.b16 %v861
          %v907 = vunpack.c.h.b16 %v861
          %v908 = vunpack.c.l.b16 %v862
          %v909 = vunpack.c.h.b16 %v862
          %v910 = vunpack.c.l.b16 %v863
          %v911 = vunpack.c.h.b16 %v863
          %v912 = vpack.c.b16 %v880, %v880
          %v913 = vpack.c.b16 %v881, %v881
          %v914 = vpack.c.b16 %v882, %v882
          %v915 = vpack.c.b16 %v883, %v883
          %v916 = vpack.c.b16 %v884, %v884
          %v917 = vpack.c.b16 %v885, %v885
          %v918 = vpack.c.b16 %v886, %v886
          %v919 = vpack.c.b16 %v887, %v887
          %v920 = vpack.c.b16 %v888, %v888
          %v921 = vpack.c.b16 %v889, %v889
          %v922 = vpack.c.b16 %v890, %v890
          %v923 = vpack.c.b16 %v891, %v891
          %v924 = vpack.c.b16 %v892, %v892
          %v925 = vpack.c.b16 %v893, %v893
          %v926 = vpack.c.b16 %v894, %v894
          %v927 = vpack.c.b16 %v895, %v895
          %v928 = vpack.c.b16 %v896, %v896
          %v929 = vpack.c.b16 %v897, %v897
          %v930 = vpack.c.b16 %v898, %v898
          %v931 = vpack.c.b16 %v899, %v899
          %v932 = vpack.c.b16 %v900, %v900
          %v933 = vpack.c.b16 %v901, %v901
          %v934 = vpack.c.b16 %v902, %v902
          %v935 = vpack.c.b16 %v903, %v903
          %v936 = vpack.c.b16 %v904, %v904
          %v937 = vpack.c.b16 %v905, %v905
          %v938 = vpack.c.b16 %v906, %v906
          %v939 = vpack.c.b16 %v907, %v907
          %v940 = vpack.c.b16 %v908, %v908
          %v941 = vpack.c.b16 %v909, %v909
          %v942 = vpack.c.b16 %v910, %v910
          %v943 = vpack.c.b16 %v911, %v911
          %976 = vst [vmem:[%s249] sm:$0xf] %v912
          %977 = vst [vmem:[%s249 + $0x4] sm:$0xf] %v913
          %978 = vst [vmem:[%s249 + $0x8] sm:$0xf] %v914
          %979 = vst [vmem:[%s249 + $0xc] sm:$0xf] %v915
          %980 = vst [vmem:[%s249 + $0x10] sm:$0xf] %v916
          %981 = vst [vmem:[%s249 + $0x14] sm:$0xf] %v917
          %982 = vst [vmem:[%s249 + $0x18] sm:$0xf] %v918
          %983 = vst [vmem:[%s249 + $0x1c] sm:$0xf] %v919
          %984 = vst [vmem:[%s249 + $0x20] sm:$0xf] %v920
          %985 = vst [vmem:[%s249 + $0x24] sm:$0xf] %v921
          %986 = vst [vmem:[%s249 + $0x28] sm:$0xf] %v922
          %987 = vst [vmem:[%s249 + $0x2c] sm:$0xf] %v923
          %988 = vst [vmem:[%s249 + $0x30] sm:$0xf] %v924
          %989 = vst [vmem:[%s249 + $0x34] sm:$0xf] %v925
          %990 = vst [vmem:[%s249 + $0x38] sm:$0xf] %v926
          %991 = vst [vmem:[%s249 + $0x3c] sm:$0xf] %v927
          %992 = vst [vmem:[%s249 + $0x40] sm:$0xf] %v928
          %993 = vst [vmem:[%s249 + $0x44] sm:$0xf] %v929
          %994 = vst [vmem:[%s249 + $0x48] sm:$0xf] %v930
          %995 = vst [vmem:[%s249 + $0x4c] sm:$0xf] %v931
          %996 = vst [vmem:[%s249 + $0x50] sm:$0xf] %v932
          %997 = vst [vmem:[%s249 + $0x54] sm:$0xf] %v933
          %998 = vst [vmem:[%s249 + $0x58] sm:$0xf] %v934
          %999 = vst [vmem:[%s249 + $0x5c] sm:$0xf] %v935
          %1000 = vst [vmem:[%s249 + $0x60] sm:$0xf] %v936
          %1001 = vst [vmem:[%s249 + $0x64] sm:$0xf] %v937
          %1002 = vst [vmem:[%s249 + $0x68] sm:$0xf] %v938
          %1003 = vst [vmem:[%s249 + $0x6c] sm:$0xf] %v939
          %1004 = vst [vmem:[%s249 + $0x70] sm:$0xf] %v940
          %1005 = vst [vmem:[%s249 + $0x74] sm:$0xf] %v941
          %1006 = vst [vmem:[%s249 + $0x78] sm:$0xf] %v942
          %1007 = vst [vmem:[%s249 + $0x7c] sm:$0xf] %v943
        $region48: #{tpu_custom_call.1} parent=31 // pred_fallthru
          _
        %s1008 = sand.u32 %s132, 1
        %s1009 = scalar_lea.sflag [#allocation5], %s1008
        %s1010 = sand.u32 %s132, 1
        %s1011 = smul.addr %s1010, 128
        %s1012 = scalar_lea.vmem [#allocation8], %s1011
        // Predicated region
        $region49: #{tpu_custom_call.1} parent=31 // pred_check
          %p1013 = pneg %p142
        $region50: #{tpu_custom_call.1} parent=31 // pred_check_branch
          %1015 = sbr.rel (%p1013) target = $region52
        $region51: #{tpu_custom_call.1} parent=31 // pred_region
          %s1016 = smul.u32 32, %s26
          %s1018 = ssub.s32 2048, 2048
          %1019 = vsyncadd %s1009, %s1018
          %s1020 = sadd.s32 %s27, %s1016
          %s1021 = smul.addr %s1020, 64
          %s1022 = scalar_lea.hbm %s3, %s1021
          %s1023 = sshll.u32 %s1012, 4
          %s1024 = int_to_ptr.vmem [resolvable:$true] %s1023
          %1029 = dma.vmem_to_hbm [thread:$0]  %s1024, 2048, %s1022, %s1009, 64, 64, 4
        $region52: #{tpu_custom_call.1} parent=31 // pred_fallthru
          _
      $region32: #{tpu_custom_call.1} parent=5 // pred_fallthru
        _
      %p1030 = scmp.le.s32.totalorder 2, %s16
      // Predicated region
      $region53: #{tpu_custom_call.1} parent=5 // pred_check
        %p1031 = pneg %p1030
      $region54: #{tpu_custom_call.1} parent=5 // pred_check_branch
        %1033 = sbr.rel (%p1031) target = $region56
      $region55: #{tpu_custom_call.1} parent=5 // pred_region
        %s1034 = ssub.s32 %s16, 2
        // Predicated region
        $region57: #{tpu_custom_call.1} parent=55 // pred_check
          %p1035 = pneg %p148
        $region58: #{tpu_custom_call.1} parent=55 // pred_check_branch
          %1037 = sbr.rel (%p1035) target = $region60
        $region59: #{tpu_custom_call.1} parent=55 // pred_region
          %s1038 = sand.u32 %s133, 1
          %s1039 = scalar_lea.sflag [#allocation5], %s1038
          %s1040 = sand.u32 %s133, 1
          %s1041 = smul.addr %s1040, 128
          %s1042 = scalar_lea.vmem [#allocation8], %s1041
          %1043 = dma.done %s1039, 2048
        $region60: #{tpu_custom_call.1} parent=55 // pred_fallthru
          _
      $region56: #{tpu_custom_call.1} parent=5 // pred_fallthru
        _
    $region6: #{tpu_custom_call.1} parent=1 // loop_footer
      %s20 = sadd.s32 1, %s16
    $region7: #{tpu_custom_call.1} parent=1 // loop_footer_branch
      %15 = sbr.rel target = $region3
    $region8: #{tpu_custom_call.1} parent=1 // loop_exit
      _
    %1044 = vsyncpa [#allocation4], 1
    %s1045 = scalar_lea.sflag [#allocation4], 1
    %1046 = vsyncpa %s1045, 1
    %1047 = vsyncpa [#allocation7], 1
    %1048 = vsyncpa [#allocation5], 1
    %s1049 = scalar_lea.sflag [#allocation5], 1
    %1050 = vsyncpa %s1049, 1

</llo_original>
